<compile_context>
chip_gen: v7x
topology: tpu7x:2x2x1
jax: 0.10.0
libtpu: 0.0.40
codegen_flags: <defaults>
</compile_context>

<pallas_src>
import functools

import jax
import jax.numpy as jnp
from jax.experimental import pallas as pl
from jax.experimental.pallas import tpu as pltpu

_LANE = 128


def _round_up(v, m):
    return (v + m - 1) // m * m


def _pad2d(a, rows, cols):
    r, c = a.shape
    if r == rows and c == cols:
        return a
    return jnp.pad(a, ((0, rows - r), (0, cols - c)))


def _adj_stream_budget_bytes():
    """VMEM budget for the double-buffered adj row-tile stream, per generation."""
    kind = ""
    try:
        kind = jax.devices()[0].device_kind.lower()
    except Exception:
        pass
    if "v7" in kind:
        return 10 * 1024 * 1024   # v7x: only 64 MiB physical VMEM per TensorCore
    if "v5 lite" in kind or "v5e" in kind or "v5lite" in kind:
        return 12 * 1024 * 1024   # v5e: 16 MiB default scoped VMEM, HBM-BW bound
    return 24 * 1024 * 1024       # v6e / default: plenty of VMEM -> big row tiles


def _pick_row_tile(n_pad, budget_bytes, bytes_per_elem=2):
    """Largest row tile (multiple of 128, divides n_pad) whose 2x-buffered adj
    stream fits the budget."""
    for tm in (1024, 512, 256, 128):
        if n_pad % tm == 0 and 2 * tm * n_pad * bytes_per_elem <= budget_bytes:
            return tm
    return 128


def _vmem_limit_bytes(tm, n_pad, resident_bytes, out_tile_bytes):
    # double-buffered adj row-tile stream + resident dense operands (counted 2x to
    # be safe) + double-buffered output tile, plus headroom.
    est = 2 * tm * n_pad * 2 + 2 * resident_bytes + 2 * out_tile_bytes
    est = int(1.5 * est) + (4 << 20)
    return max(32 << 20, min(96 << 20, est))


def _gcn_layer_kernel(adj_ref, feat_ref, w_ref, b_ref, out_ref, *, apply_relu):
    # y_tile = (adj_tile @ feat) @ W + b   (== adj_tile @ (feat @ W) + b exactly);
    # re-associated so every row tile is independent -> grid axis can be "parallel".
    af = jnp.dot(adj_ref[...], feat_ref[...], preferred_element_type=jnp.float32)
    y = jnp.dot(af.astype(jnp.bfloat16), w_ref[...],
                preferred_element_type=jnp.float32)
    y = y + b_ref[...]
    if apply_relu:
        y = jnp.maximum(y, 0.0)
    out_ref[...] = y.astype(out_ref.dtype)


def gcn_forward(x, adj, w1, b1, w2, b2):
    n, f = x.shape
    h_dim = w1.shape[1]          # n_hidden (128 in the module)
    r = w2.shape[1]              # n_representation

    n_pad = _round_up(n, _LANE)
    f_pad = _round_up(f, _LANE)
    h_pad = _round_up(h_dim, _LANE)
    r_pad = _round_up(r, _LANE)

    # Pad to lane-dense shapes; cast the streaming/matmul operands to bf16
    # (halves adj HBM traffic, hits the bf16 MXU path); biases stay f32.
    x_p = _pad2d(x, n_pad, f_pad).astype(jnp.bfloat16)
    adj_p = _pad2d(adj, n_pad, n_pad).astype(jnp.bfloat16)
    w1_p = _pad2d(w1, f_pad, h_pad).astype(jnp.bfloat16)
    w2_p = _pad2d(w2, h_pad, r_pad).astype(jnp.bfloat16)
    b1_p = _pad2d(b1.reshape(1, -1), 1, h_pad).astype(jnp.float32)
    b2_p = _pad2d(b2.reshape(1, -1), 1, r_pad).astype(jnp.float32)

    tm = _pick_row_tile(n_pad, _adj_stream_budget_bytes())
    grid = (n_pad // tm,)

    def row_tile(cols):
        return pl.BlockSpec((tm, cols), lambda i: (i, 0))

    def resident(shape):
        return pl.BlockSpec(shape, lambda i: (0,) * len(shape))

    def layer(adj_arr, feat, w, b, out_dtype, apply_relu):
        n_rows, feat_cols = feat.shape
        out_cols = w.shape[1]
        flops = 2 * n_pad * n_pad * feat_cols + 2 * n_pad * feat_cols * out_cols
        bytes_accessed = (adj_arr.size + feat.size + w.size) * 2 + b.size * 4 \
            + n_pad * out_cols * jnp.dtype(out_dtype).itemsize
        resident_bytes = (feat.size + w.size) * 2 + b.size * 4
        out_tile_bytes = tm * out_cols * jnp.dtype(out_dtype).itemsize
        return pl.pallas_call(
            functools.partial(_gcn_layer_kernel, apply_relu=apply_relu),
            out_shape=jax.ShapeDtypeStruct((n_pad, out_cols), out_dtype),
            grid_spec=pltpu.PrefetchScalarGridSpec(
                num_scalar_prefetch=0,
                grid=grid,
                in_specs=[
                    row_tile(n_pad),                 # adj row tile (streamed)
                    resident((n_rows, feat_cols)),   # dense node features
                    resident(w.shape),               # layer weight
                    resident(b.shape),               # bias (1, out_cols)
                ],
                out_specs=row_tile(out_cols),
            ),
            compiler_params=pltpu.CompilerParams(
                dimension_semantics=("parallel",),
                vmem_limit_bytes=_vmem_limit_bytes(
                    tm, n_pad, resident_bytes, out_tile_bytes),
            ),
            cost_estimate=pl.CostEstimate(
                flops=flops, transcendentals=0, bytes_accessed=bytes_accessed),
        )(adj_arr, feat, w, b)

    # gc1: h = relu(adj @ (x @ W1) + b1)   (kept in bf16 for the second adj stream)
    h = layer(adj_p, x_p, w1_p, b1_p, jnp.bfloat16, apply_relu=True)
    # gc2: out = adj @ (h @ W2) + b2       (lane-dense f32 output, padded to 128)
    out_p = layer(adj_p, h, w2_p, b2_p, jnp.float32, apply_relu=False)

    return out_p[:n, :r]


def xavier_uniform(key, fan_in, fan_out):
    bound = jnp.sqrt(6.0 / (fan_in + fan_out))
    return jax.random.uniform(
        key, (fan_in, fan_out), dtype=jnp.float32, minval=-bound, maxval=bound
    )


if __name__ == "__main__":
    # Small shapes consistent with the module; node_count deliberately not a
    # multiple of 8/128 to exercise the padding path.
    node_count = 200        # N
    node_dim = 64           # n_feature
    n_hidden = 128          # fixed in the module
    n_representation = 32

    key = jax.random.PRNGKey(0)
    k_x, k_a, k_w1, k_w2 = jax.random.split(key, 4)

    x = jax.random.normal(k_x, (node_count, node_dim), dtype=jnp.float32)
    adj_raw = jax.random.uniform(k_a, (node_count, node_count), dtype=jnp.float32)
    adj = adj_raw / jnp.sum(adj_raw, axis=1, keepdims=True)  # row-normalized dense adj

    # Parameters (xavier_uniform_ like init_weights; GraphConvolution biases -> zeros).
    w1 = xavier_uniform(k_w1, node_dim, n_hidden)
    b1 = jnp.zeros((1, n_hidden), dtype=jnp.float32)
    w2 = xavier_uniform(k_w2, n_hidden, n_representation)
    b2 = jnp.zeros((1, n_representation), dtype=jnp.float32)

    out = gcn_forward(x, adj, w1, b1, w2, b2)
    out = jax.block_until_ready(out)

    # Pure-JAX f32 reference (kernel uses bf16 operands with f32 accumulation,
    # so compare with a max-normalized relative-error check).
    h_ref = jnp.maximum(adj @ (x @ w1) + b1, 0.0)
    out_ref = adj @ (h_ref @ w2) + b2

    assert out.shape == (node_count, n_representation)
    rel_err = float(
        jnp.max(jnp.abs(out - out_ref)) / (jnp.max(jnp.abs(out_ref)) + 1e-12)
    )
    assert rel_err < 5e-2, f"relative error too large: {rel_err}"

    print("KERNEL_OK")
</pallas_src>

<mosaic_0001>
module attributes {stable_mosaic.version = 11 : i64} {
  func.func @_gcn_layer_kernel(%arg0: i32, %arg1: memref<256x256xbf16, #tpu.memory_space<vmem>>, %arg2: memref<256x128xbf16, #tpu.memory_space<vmem>>, %arg3: memref<128x128xbf16, #tpu.memory_space<vmem>>, %arg4: memref<1x128xf32, #tpu.memory_space<vmem>>, %arg5: memref<256x128xbf16, #tpu.memory_space<vmem>>) attributes {dimension_semantics = [#tpu.dimension_semantics<parallel>], iteration_bounds = array<i64: 1>, scalar_prefetch = 0 : i64, scratch_operands = 0 : i64, tpu.core_type = #tpu.core_type<tc>, window_params = [{transform_indices = @transform_0, window_bounds = array<i64: 256, 256>}, {pipeline_mode = #tpu.pipeline_mode<synchronous>, transform_indices = @transform_1, window_bounds = array<i64: 256, 128>}, {pipeline_mode = #tpu.pipeline_mode<synchronous>, transform_indices = @transform_2, window_bounds = array<i64: 128, 128>}, {pipeline_mode = #tpu.pipeline_mode<synchronous>, transform_indices = @transform_3, window_bounds = array<i64: 1, 128>}, {transform_indices = @transform_4, window_bounds = array<i64: 256, 128>}]} {
    %c0 = arith.constant 0 : index
    %c0_0 = arith.constant 0 : index
    %0 = vector.load %arg1[%c0, %c0_0] : memref<256x256xbf16, #tpu.memory_space<vmem>>, vector<256x256xbf16>
    %c0_1 = arith.constant 0 : index
    %c0_2 = arith.constant 0 : index
    %1 = vector.load %arg2[%c0_1, %c0_2] : memref<256x128xbf16, #tpu.memory_space<vmem>>, vector<256x128xbf16>
    %cst = arith.constant dense<0.000000e+00> : vector<256x128xf32>
    %2 = tpu.matmul %0, %1, %cst {dimension_numbers = #tpu.dot_dimension_numbers<[1], [0], [0], [1], [0, 0, 1, 1], [], []>} : vector<256x256xbf16>, vector<256x128xbf16>, vector<256x128xf32> -> vector<256x128xf32>
    %3 = arith.truncf %2 : vector<256x128xf32> to vector<256x128xbf16>
    %c0_3 = arith.constant 0 : index
    %c0_4 = arith.constant 0 : index
    %4 = vector.load %arg3[%c0_3, %c0_4] : memref<128x128xbf16, #tpu.memory_space<vmem>>, vector<128x128xbf16>
    %cst_5 = arith.constant dense<0.000000e+00> : vector<256x128xf32>
    %5 = tpu.matmul %3, %4, %cst_5 {dimension_numbers = #tpu.dot_dimension_numbers<[1], [0], [0], [1], [0, 0, 1, 1], [], []>} : vector<256x128xbf16>, vector<128x128xbf16>, vector<256x128xf32> -> vector<256x128xf32>
    %c0_6 = arith.constant 0 : index
    %c0_7 = arith.constant 0 : index
    %6 = vector.load %arg4[%c0_6, %c0_7] : memref<1x128xf32, #tpu.memory_space<vmem>>, vector<1x128xf32>
    %7 = vector.broadcast %6 : vector<1x128xf32> to vector<256x128xf32>
    %8 = arith.addf %5, %7 : vector<256x128xf32>
    %cst_8 = arith.constant 0.000000e+00 : f32
    %9 = vector.broadcast %cst_8 : f32 to vector<256x128xf32>
    %10 = arith.maximumf %8, %9 : vector<256x128xf32>
    %11 = arith.truncf %10 : vector<256x128xf32> to vector<256x128xbf16>
    %c0_9 = arith.constant 0 : index
    %c0_10 = arith.constant 0 : index
    %12 = vector.load %arg5[%c0_9, %c0_10] : memref<256x128xbf16, #tpu.memory_space<vmem>>, vector<256x128xbf16>
    tpu.vector_store %arg5[%c0_9, %c0_10], %11 {strides = array<i32>} : memref<256x128xbf16, #tpu.memory_space<vmem>>, vector<256x128xbf16>,
    return
  }
  func.func @transform_0(%arg0: i32) -> (i32, i32) {
    %c0_i32 = arith.constant 0 : i32
    %c0_i32_0 = arith.constant 0 : i32
    return %arg0, %c0_i32 : i32, i32
  }
  func.func @transform_1(%arg0: i32) -> (i32, i32) {
    %c0_i32 = arith.constant 0 : i32
    %c0_i32_0 = arith.constant 0 : i32
    %c0_i32_1 = arith.constant 0 : i32
    return %c0_i32, %c0_i32_0 : i32, i32
  }
  func.func @transform_2(%arg0: i32) -> (i32, i32) {
    %c0_i32 = arith.constant 0 : i32
    %c0_i32_0 = arith.constant 0 : i32
    %c0_i32_1 = arith.constant 0 : i32
    return %c0_i32, %c0_i32_0 : i32, i32
  }
  func.func @transform_3(%arg0: i32) -> (i32, i32) {
    %c0_i32 = arith.constant 0 : i32
    %c0_i32_0 = arith.constant 0 : i32
    %c0_i32_1 = arith.constant 0 : i32
    return %c0_i32, %c0_i32_0 : i32, i32
  }
  func.func @transform_4(%arg0: i32) -> (i32, i32) {
    %c0_i32 = arith.constant 0 : i32
    %c0_i32_0 = arith.constant 0 : i32
    return %arg0, %c0_i32 : i32, i32
  }
}

</mosaic_0001>

<llo_original>
// kernel: tpu_custom_call.1
$region0: #{tpu_custom_call.1}
  #allocation0 [shape = 'u32[]', space=smem, size = 0x4, offset = 0x4, fixed_abs, tag = 'smem constant byte address 0x4 - core index']
  #allocation1 [shape = 'u32[144,128]{1,0:T(1,128)}', space=vmem, size = 0x12000, scoped, tag = 'internal scratch']
  %s0 = inlined_call_operand.hbm [shape: bf16[256,256], index: 0, kind: input, shape index: {}]
  %s1 = inlined_call_operand.hbm [shape: bf16[256,128], index: 1, kind: input, shape index: {}]
  %s2 = inlined_call_operand.hbm [shape: bf16[128,128], index: 2, kind: input, shape index: {}]
  %s3 = inlined_call_operand.vmem [shape: f32[1,128], index: 3, kind: input, shape index: {}]
  %s4 = inlined_call_operand.hbm [shape: bf16[256,128], index: 4, kind: output, shape index: {}]
  %s5 = sld [smem:[#allocation0]]
  $region38: #{tpu_custom_call.1} parent=0
    _
  %s7 = ssub.s32 1, %s5
  %s8 = scalar_select 0, %s7, %s5
  $region1: #{tpu_custom_call.1} parent=0
    #allocation2 [shape = 'u8[131072]{0}', space=vmem, size = 0x20000, scoped, tag = 'input window, operand 0, single buffered']
    #allocation3 [shape = 's32[1]{0}', space=sflag, size = 0x4, scoped, tag = 'scoped memory for tpu_custom_call.1']
    #allocation4 [shape = 's32[1]{0}', space=sflag, size = 0x4, scoped, tag = 'scoped memory for tpu_custom_call.1']
    #allocation5 [shape = 'u8[65536]{0}', space=vmem, size = 0x10000, scoped, tag = 'input window, operand 1, single buffered']
    #allocation6 [shape = 's32[1]{0}', space=sflag, size = 0x4, scoped, tag = 'scoped memory for tpu_custom_call.1']
    #allocation7 [shape = 'u8[32768]{0}', space=vmem, size = 0x8000, scoped, tag = 'input window, operand 2, single buffered']
    #allocation8 [shape = 'u8[65536]{0}', space=vmem, size = 0x10000, scoped, tag = 'output window, operand 0, single buffered']
    %9 = vsyncpa [#allocation3], 0
    %10 = vsyncpa [#allocation6], 0
    %11 = vsyncpa [#allocation4], 0
    // Predicated region
    $region2: #{tpu_custom_call.1} parent=1 // pred_check
      _
    $region3: #{tpu_custom_call.1} parent=1 // pred_check_branch
      %13 = sbr.rel (0) target = $region5
    $region4: #{tpu_custom_call.1} parent=1 // pred_region
      %s15 = ssub.s32 4096, 4096
      %16 = vsyncadd [#allocation3], %s15
      %s17 = sshll.u32 [#allocation2], 4
      %s18 = int_to_ptr.vmem [resolvable:$true] %s17
      %23 = dma.hbm_to_vmem [thread:$0]  %s0, 4096, %s18, [#allocation3], 128, 128, 8
    $region5: #{tpu_custom_call.1} parent=1 // pred_fallthru
      _
    // Predicated region
    $region6: #{tpu_custom_call.1} parent=1 // pred_check
      _
    $region7: #{tpu_custom_call.1} parent=1 // pred_check_branch
      %25 = sbr.rel (0) target = $region9
    $region8: #{tpu_custom_call.1} parent=1 // pred_region
      %s27 = ssub.s32 2048, 2048
      %28 = vsyncadd [#allocation6], %s27
      %s29 = sshll.u32 [#allocation5], 4
      %s30 = int_to_ptr.vmem [resolvable:$true] %s29
      %35 = dma.hbm_to_vmem [thread:$0]  %s1, 2048, %s30, [#allocation6], 64, 64, 4
    $region9: #{tpu_custom_call.1} parent=1 // pred_fallthru
      _
    // Predicated region
    $region10: #{tpu_custom_call.1} parent=1 // pred_check
      _
    $region11: #{tpu_custom_call.1} parent=1 // pred_check_branch
      %37 = sbr.rel (0) target = $region13
    $region12: #{tpu_custom_call.1} parent=1 // pred_region
      %s39 = ssub.s32 1024, 1024
      %40 = vsyncadd [#allocation6], %s39
      %s41 = sshll.u32 [#allocation7], 4
      %s42 = int_to_ptr.vmem [resolvable:$true] %s41
      %47 = dma.hbm_to_vmem [thread:$0]  %s2, 1024, %s42, [#allocation6], 64, 64, 4
    $region13: #{tpu_custom_call.1} parent=1 // pred_fallthru
      _
    // Predicated region
    $region14: #{tpu_custom_call.1} parent=1 // pred_check
      _
    $region15: #{tpu_custom_call.1} parent=1 // pred_check_branch
      %49 = sbr.rel (0) target = $region17
    $region16: #{tpu_custom_call.1} parent=1 // pred_region
      _
    $region17: #{tpu_custom_call.1} parent=1 // pred_fallthru
      _
    // Predicated region
    $region18: #{tpu_custom_call.1} parent=1 // pred_check
      _
    $region19: #{tpu_custom_call.1} parent=1 // pred_check_branch
      %51 = sbr.rel (0) target = $region21
    $region20: #{tpu_custom_call.1} parent=1 // pred_region
      %52 = dma.done [#allocation3], 4096
    $region21: #{tpu_custom_call.1} parent=1 // pred_fallthru
      _
    // Predicated region
    $region22: #{tpu_custom_call.1} parent=1 // pred_check
      _
    $region23: #{tpu_custom_call.1} parent=1 // pred_check_branch
      %54 = sbr.rel (0) target = $region25
    $region24: #{tpu_custom_call.1} parent=1 // pred_region
      %55 = dma.done [#allocation6], 2048
    $region25: #{tpu_custom_call.1} parent=1 // pred_fallthru
      _
    // Predicated region
    $region26: #{tpu_custom_call.1} parent=1 // pred_check
      _
    $region27: #{tpu_custom_call.1} parent=1 // pred_check_branch
      %57 = sbr.rel (0) target = $region29
    $region28: #{tpu_custom_call.1} parent=1 // pred_region
      %58 = dma.done [#allocation6], 1024
    $region29: #{tpu_custom_call.1} parent=1 // pred_fallthru
      _
    %v60 = vld [vmem:[#allocation2] sm:$0xff]
    %v61 = vld [vmem:[#allocation2 + $0x8] sm:$0xff]
    %v62 = vld [vmem:[#allocation2 + $0x10] sm:$0xff]
    %v63 = vld [vmem:[#allocation2 + $0x18] sm:$0xff]
    %v64 = vld [vmem:[#allocation2 + $0x20] sm:$0xff]
    %v65 = vld [vmem:[#allocation2 + $0x28] sm:$0xff]
    %v66 = vld [vmem:[#allocation2 + $0x30] sm:$0xff]
    %v67 = vld [vmem:[#allocation2 + $0x38] sm:$0xff]
    %v68 = vld [vmem:[#allocation2 + $0x40] sm:$0xff]
    %v69 = vld [vmem:[#allocation2 + $0x48] sm:$0xff]
    %v70 = vld [vmem:[#allocation2 + $0x50] sm:$0xff]
    %v71 = vld [vmem:[#allocation2 + $0x58] sm:$0xff]
    %v72 = vld [vmem:[#allocation2 + $0x60] sm:$0xff]
    %v73 = vld [vmem:[#allocation2 + $0x68] sm:$0xff]
    %v74 = vld [vmem:[#allocation2 + $0x70] sm:$0xff]
    %v75 = vld [vmem:[#allocation2 + $0x78] sm:$0xff]
    %v76 = vld [vmem:[#allocation2 + $0x80] sm:$0xff]
    %v77 = vld [vmem:[#allocation2 + $0x88] sm:$0xff]
    %v78 = vld [vmem:[#allocation2 + $0x90] sm:$0xff]
    %v79 = vld [vmem:[#allocation2 + $0x98] sm:$0xff]
    %v80 = vld [vmem:[#allocation2 + $0xa0] sm:$0xff]
    %v81 = vld [vmem:[#allocation2 + $0xa8] sm:$0xff]
    %v82 = vld [vmem:[#allocation2 + $0xb0] sm:$0xff]
    %v83 = vld [vmem:[#allocation2 + $0xb8] sm:$0xff]
    %v84 = vld [vmem:[#allocation2 + $0xc0] sm:$0xff]
    %v85 = vld [vmem:[#allocation2 + $0xc8] sm:$0xff]
    %v86 = vld [vmem:[#allocation2 + $0xd0] sm:$0xff]
    %v87 = vld [vmem:[#allocation2 + $0xd8] sm:$0xff]
    %v88 = vld [vmem:[#allocation2 + $0xe0] sm:$0xff]
    %v89 = vld [vmem:[#allocation2 + $0xe8] sm:$0xff]
    %v90 = vld [vmem:[#allocation2 + $0xf0] sm:$0xff]
    %v91 = vld [vmem:[#allocation2 + $0xf8] sm:$0xff]
    %v92 = vld [vmem:[#allocation5] sm:$0xf]
    %v93 = vld [vmem:[#allocation5 + $0x4] sm:$0xf]
    %v94 = vld [vmem:[#allocation5 + $0x8] sm:$0xf]
    %v95 = vld [vmem:[#allocation5 + $0xc] sm:$0xf]
    %v96 = vld [vmem:[#allocation5 + $0x10] sm:$0xf]
    %v97 = vld [vmem:[#allocation5 + $0x14] sm:$0xf]
    %v98 = vld [vmem:[#allocation5 + $0x18] sm:$0xf]
    %v99 = vld [vmem:[#allocation5 + $0x1c] sm:$0xf]
    %v100 = vld [vmem:[#allocation5 + $0x20] sm:$0xf]
    %v101 = vld [vmem:[#allocation5 + $0x24] sm:$0xf]
    %v102 = vld [vmem:[#allocation5 + $0x28] sm:$0xf]
    %v103 = vld [vmem:[#allocation5 + $0x2c] sm:$0xf]
    %v104 = vld [vmem:[#allocation5 + $0x30] sm:$0xf]
    %v105 = vld [vmem:[#allocation5 + $0x34] sm:$0xf]
    %v106 = vld [vmem:[#allocation5 + $0x38] sm:$0xf]
    %v107 = vld [vmem:[#allocation5 + $0x3c] sm:$0xf]
    %v108 = vld [vmem:[#allocation5 + $0x40] sm:$0xf]
    %v109 = vld [vmem:[#allocation5 + $0x44] sm:$0xf]
    %v110 = vld [vmem:[#allocation5 + $0x48] sm:$0xf]
    %v111 = vld [vmem:[#allocation5 + $0x4c] sm:$0xf]
    %v112 = vld [vmem:[#allocation5 + $0x50] sm:$0xf]
    %v113 = vld [vmem:[#allocation5 + $0x54] sm:$0xf]
    %v114 = vld [vmem:[#allocation5 + $0x58] sm:$0xf]
    %v115 = vld [vmem:[#allocation5 + $0x5c] sm:$0xf]
    %v116 = vld [vmem:[#allocation5 + $0x60] sm:$0xf]
    %v117 = vld [vmem:[#allocation5 + $0x64] sm:$0xf]
    %v118 = vld [vmem:[#allocation5 + $0x68] sm:$0xf]
    %v119 = vld [vmem:[#allocation5 + $0x6c] sm:$0xf]
    %v120 = vld [vmem:[#allocation5 + $0x70] sm:$0xf]
    %v121 = vld [vmem:[#allocation5 + $0x74] sm:$0xf]
    %v122 = vld [vmem:[#allocation5 + $0x78] sm:$0xf]
    %v123 = vld [vmem:[#allocation5 + $0x7c] sm:$0xf]
    %v156 = vunpack.c.l.b16 %v60
    %v157 = vunpack.c.h.b16 %v60
    %v158 = vunpack.c.l.b16 %v61
    %v159 = vunpack.c.h.b16 %v61
    %v160 = vunpack.c.l.b16 %v62
    %v161 = vunpack.c.h.b16 %v62
    %v162 = vunpack.c.l.b16 %v63
    %v163 = vunpack.c.h.b16 %v63
    %v164 = vunpack.c.l.b16 %v64
    %v165 = vunpack.c.h.b16 %v64
    %v166 = vunpack.c.l.b16 %v65
    %v167 = vunpack.c.h.b16 %v65
    %v168 = vunpack.c.l.b16 %v66
    %v169 = vunpack.c.h.b16 %v66
    %v170 = vunpack.c.l.b16 %v67
    %v171 = vunpack.c.h.b16 %v67
    %v172 = vunpack.c.l.b16 %v68
    %v173 = vunpack.c.h.b16 %v68
    %v174 = vunpack.c.l.b16 %v69
    %v175 = vunpack.c.h.b16 %v69
    %v176 = vunpack.c.l.b16 %v70
    %v177 = vunpack.c.h.b16 %v70
    %v178 = vunpack.c.l.b16 %v71
    %v179 = vunpack.c.h.b16 %v71
    %v180 = vunpack.c.l.b16 %v72
    %v181 = vunpack.c.h.b16 %v72
    %v182 = vunpack.c.l.b16 %v73
    %v183 = vunpack.c.h.b16 %v73
    %v184 = vunpack.c.l.b16 %v74
    %v185 = vunpack.c.h.b16 %v74
    %v186 = vunpack.c.l.b16 %v75
    %v187 = vunpack.c.h.b16 %v75
    %v188 = vunpack.c.l.b16 %v76
    %v189 = vunpack.c.h.b16 %v76
    %v190 = vunpack.c.l.b16 %v77
    %v191 = vunpack.c.h.b16 %v77
    %v192 = vunpack.c.l.b16 %v78
    %v193 = vunpack.c.h.b16 %v78
    %v194 = vunpack.c.l.b16 %v79
    %v195 = vunpack.c.h.b16 %v79
    %v196 = vunpack.c.l.b16 %v80
    %v197 = vunpack.c.h.b16 %v80
    %v198 = vunpack.c.l.b16 %v81
    %v199 = vunpack.c.h.b16 %v81
    %v200 = vunpack.c.l.b16 %v82
    %v201 = vunpack.c.h.b16 %v82
    %v202 = vunpack.c.l.b16 %v83
    %v203 = vunpack.c.h.b16 %v83
    %v204 = vunpack.c.l.b16 %v84
    %v205 = vunpack.c.h.b16 %v84
    %v206 = vunpack.c.l.b16 %v85
    %v207 = vunpack.c.h.b16 %v85
    %v208 = vunpack.c.l.b16 %v86
    %v209 = vunpack.c.h.b16 %v86
    %v210 = vunpack.c.l.b16 %v87
    %v211 = vunpack.c.h.b16 %v87
    %v212 = vunpack.c.l.b16 %v88
    %v213 = vunpack.c.h.b16 %v88
    %v214 = vunpack.c.l.b16 %v89
    %v215 = vunpack.c.h.b16 %v89
    %v216 = vunpack.c.l.b16 %v90
    %v217 = vunpack.c.h.b16 %v90
    %v218 = vunpack.c.l.b16 %v91
    %v219 = vunpack.c.h.b16 %v91
    %v220 = vpack.c.b16 %v158, %v156
    %v221 = vpack.c.b16 %v159, %v157
    %v222 = vpack.c.b16 %v162, %v160
    %v223 = vpack.c.b16 %v163, %v161
    %v224 = vpack.c.b16 %v166, %v164
    %v225 = vpack.c.b16 %v167, %v165
    %v226 = vpack.c.b16 %v170, %v168
    %v227 = vpack.c.b16 %v171, %v169
    %v228 = vpack.c.b16 %v174, %v172
    %v229 = vpack.c.b16 %v175, %v173
    %v230 = vpack.c.b16 %v178, %v176
    %v231 = vpack.c.b16 %v179, %v177
    %v232 = vpack.c.b16 %v182, %v180
    %v233 = vpack.c.b16 %v183, %v181
    %v234 = vpack.c.b16 %v186, %v184
    %v235 = vpack.c.b16 %v187, %v185
    %v236 = vpack.c.b16 %v190, %v188
    %v237 = vpack.c.b16 %v191, %v189
    %v238 = vpack.c.b16 %v194, %v192
    %v239 = vpack.c.b16 %v195, %v193
    %v240 = vpack.c.b16 %v198, %v196
    %v241 = vpack.c.b16 %v199, %v197
    %v242 = vpack.c.b16 %v202, %v200
    %v243 = vpack.c.b16 %v203, %v201
    %v244 = vpack.c.b16 %v206, %v204
    %v245 = vpack.c.b16 %v207, %v205
    %v246 = vpack.c.b16 %v210, %v208
    %v247 = vpack.c.b16 %v211, %v209
    %v248 = vpack.c.b16 %v214, %v212
    %v249 = vpack.c.b16 %v215, %v213
    %v250 = vpack.c.b16 %v218, %v216
    %v251 = vpack.c.b16 %v219, %v217
    %v316 = vunpack.c.l.b16 %v92
    %v317 = vunpack.c.l.b16 %v93
    %v318 = vunpack.c.l.b16 %v94
    %v319 = vunpack.c.l.b16 %v95
    %v320 = vunpack.c.l.b16 %v96
    %v321 = vunpack.c.l.b16 %v97
    %v322 = vunpack.c.l.b16 %v98
    %v323 = vunpack.c.l.b16 %v99
    %v324 = vunpack.c.l.b16 %v100
    %v325 = vunpack.c.l.b16 %v101
    %v326 = vunpack.c.l.b16 %v102
    %v327 = vunpack.c.l.b16 %v103
    %v328 = vunpack.c.l.b16 %v104
    %v329 = vunpack.c.l.b16 %v105
    %v330 = vunpack.c.l.b16 %v106
    %v331 = vunpack.c.l.b16 %v107
    %v332 = vunpack.c.l.b16 %v108
    %v333 = vunpack.c.l.b16 %v109
    %v334 = vunpack.c.l.b16 %v110
    %v335 = vunpack.c.l.b16 %v111
    %v336 = vunpack.c.l.b16 %v112
    %v337 = vunpack.c.l.b16 %v113
    %v338 = vunpack.c.l.b16 %v114
    %v339 = vunpack.c.l.b16 %v115
    %v340 = vunpack.c.l.b16 %v116
    %v341 = vunpack.c.l.b16 %v117
    %v342 = vunpack.c.l.b16 %v118
    %v343 = vunpack.c.l.b16 %v119
    %v344 = vunpack.c.l.b16 %v120
    %v345 = vunpack.c.l.b16 %v121
    %v346 = vunpack.c.l.b16 %v122
    %v347 = vunpack.c.l.b16 %v123
    %v348 = vpack.c.b16 %v317, %v316
    %v349 = vpack.c.b16 %v319, %v318
    %v350 = vpack.c.b16 %v321, %v320
    %v351 = vpack.c.b16 %v323, %v322
    %v352 = vpack.c.b16 %v325, %v324
    %v353 = vpack.c.b16 %v327, %v326
    %v354 = vpack.c.b16 %v329, %v328
    %v355 = vpack.c.b16 %v331, %v330
    %v356 = vpack.c.b16 %v333, %v332
    %v357 = vpack.c.b16 %v335, %v334
    %v358 = vpack.c.b16 %v337, %v336
    %v359 = vpack.c.b16 %v339, %v338
    %v360 = vpack.c.b16 %v341, %v340
    %v361 = vpack.c.b16 %v343, %v342
    %v362 = vpack.c.b16 %v345, %v344
    %v363 = vpack.c.b16 %v347, %v346
    %380 = vmatprep.subr.bf16.mxu0 0
    %381 = vmatpush1.bf16.msra.mxu0 %v348
    %382 = vmatprep.subr.bf16.mxu0 0
    %383 = vmatpush1.bf16.msra.mxu0 %v349
    %384 = vmatprep.subr.bf16.mxu0 0
    %385 = vmatpush1.bf16.msra.mxu0 %v350
    %386 = vmatprep.subr.bf16.mxu0 0
    %387 = vmatpush1.bf16.msra.mxu0 %v351
    %388 = vmatprep.subr.bf16.mxu0 0
    %389 = vmatpush1.bf16.msra.mxu0 %v352
    %390 = vmatprep.subr.bf16.mxu0 0
    %391 = vmatpush1.bf16.msra.mxu0 %v353
    %392 = vmatprep.subr.bf16.mxu0 0
    %393 = vmatpush1.bf16.msra.mxu0 %v354
    %394 = vmatprep.subr.bf16.mxu0 0
    %395 = vmatpush1.bf16.msra.mxu0 %v355
    %396 = vmatprep.subr.bf16.mxu0 0
    %397 = vmatpush1.bf16.msra.mxu0 %v356
    %398 = vmatprep.subr.bf16.mxu0 0
    %399 = vmatpush1.bf16.msra.mxu0 %v357
    %400 = vmatprep.subr.bf16.mxu0 0
    %401 = vmatpush1.bf16.msra.mxu0 %v358
    %402 = vmatprep.subr.bf16.mxu0 0
    %403 = vmatpush1.bf16.msra.mxu0 %v359
    %404 = vmatprep.subr.bf16.mxu0 0
    %405 = vmatpush1.bf16.msra.mxu0 %v360
    %406 = vmatprep.subr.bf16.mxu0 0
    %407 = vmatpush1.bf16.msra.mxu0 %v361
    %408 = vmatprep.subr.bf16.mxu0 0
    %409 = vmatpush1.bf16.msra.mxu0 %v362
    %410 = vmatprep.subr.bf16.mxu0 0
    %411 = vmatpush1.bf16.msra.mxu0 %v363
    %412 = vmatprep.mubr.bf16.mxu0 %v221
    %413 = vmatmul.mubr.bf16.gmra.mrb[0].mxu0 %v220
    %v414 = vpop.f32.mrb[0].mxu0
    %v415 = vadd.f32 0.0, %v414
    %v416 = vpop.f32.mrb[0].mxu0
    %v417 = vpop.f32.mrb[0].mxu0
    %v418 = vadd.f32 0.0, %v417
    %v419 = vpop.f32.mrb[0].mxu0
    %420 = vmatprep.mubr.bf16.mxu0 %v223
    %421 = vmatmul.mubr.bf16.gmra.mrb[0].mxu0 %v222
    %v422 = vpop.f32.mrb[0].mxu0
    %v423 = vadd.f32 0.0, %v422
    %v424 = vpop.f32.mrb[0].mxu0
    %v425 = vpop.f32.mrb[0].mxu0
    %v426 = vadd.f32 0.0, %v425
    %v427 = vpop.f32.mrb[0].mxu0
    %428 = vmatprep.mubr.bf16.mxu0 %v225
    %429 = vmatmul.mubr.bf16.gmra.mrb[0].mxu0 %v224
    %v430 = vpop.f32.mrb[0].mxu0
    %v431 = vadd.f32 0.0, %v430
    %v432 = vpop.f32.mrb[0].mxu0
    %v433 = vpop.f32.mrb[0].mxu0
    %v434 = vadd.f32 0.0, %v433
    %v435 = vpop.f32.mrb[0].mxu0
    %436 = vmatprep.mubr.bf16.mxu0 %v227
    %437 = vmatmul.mubr.bf16.gmra.mrb[0].mxu0 %v226
    %v438 = vpop.f32.mrb[0].mxu0
    %v439 = vadd.f32 0.0, %v438
    %v440 = vpop.f32.mrb[0].mxu0
    %v441 = vpop.f32.mrb[0].mxu0
    %v442 = vadd.f32 0.0, %v441
    %v443 = vpop.f32.mrb[0].mxu0
    %444 = vmatprep.mubr.bf16.mxu0 %v229
    %445 = vmatmul.mubr.bf16.gmra.mrb[0].mxu0 %v228
    %v446 = vpop.f32.mrb[0].mxu0
    %v447 = vadd.f32 0.0, %v446
    %v448 = vpop.f32.mrb[0].mxu0
    %v449 = vpop.f32.mrb[0].mxu0
    %v450 = vadd.f32 0.0, %v449
    %v451 = vpop.f32.mrb[0].mxu0
    %452 = vmatprep.mubr.bf16.mxu0 %v231
    %453 = vmatmul.mubr.bf16.gmra.mrb[0].mxu0 %v230
    %v454 = vpop.f32.mrb[0].mxu0
    %v455 = vadd.f32 0.0, %v454
    %v456 = vpop.f32.mrb[0].mxu0
    %v457 = vpop.f32.mrb[0].mxu0
    %v458 = vadd.f32 0.0, %v457
    %v459 = vpop.f32.mrb[0].mxu0
    %460 = vmatprep.mubr.bf16.mxu0 %v233
    %461 = vmatmul.mubr.bf16.gmra.mrb[0].mxu0 %v232
    %v462 = vpop.f32.mrb[0].mxu0
    %v463 = vadd.f32 0.0, %v462
    %v464 = vpop.f32.mrb[0].mxu0
    %v465 = vpop.f32.mrb[0].mxu0
    %v466 = vadd.f32 0.0, %v465
    %v467 = vpop.f32.mrb[0].mxu0
    %468 = vmatprep.mubr.bf16.mxu0 %v235
    %469 = vmatmul.mubr.bf16.gmra.mrb[0].mxu0 %v234
    %v470 = vpop.f32.mrb[0].mxu0
    %v471 = vadd.f32 0.0, %v470
    %v472 = vpop.f32.mrb[0].mxu0
    %v473 = vpop.f32.mrb[0].mxu0
    %v474 = vadd.f32 0.0, %v473
    %v475 = vpop.f32.mrb[0].mxu0
    %476 = vmatprep.mubr.bf16.mxu0 %v237
    %477 = vmatmul.mubr.bf16.gmra.mrb[0].mxu0 %v236
    %v478 = vpop.f32.mrb[0].mxu0
    %v479 = vadd.f32 0.0, %v478
    %v480 = vpop.f32.mrb[0].mxu0
    %v481 = vpop.f32.mrb[0].mxu0
    %v482 = vadd.f32 0.0, %v481
    %v483 = vpop.f32.mrb[0].mxu0
    %484 = vmatprep.mubr.bf16.mxu0 %v239
    %485 = vmatmul.mubr.bf16.gmra.mrb[0].mxu0 %v238
    %v486 = vpop.f32.mrb[0].mxu0
    %v487 = vadd.f32 0.0, %v486
    %v488 = vpop.f32.mrb[0].mxu0
    %v489 = vpop.f32.mrb[0].mxu0
    %v490 = vadd.f32 0.0, %v489
    %v491 = vpop.f32.mrb[0].mxu0
    %492 = vmatprep.mubr.bf16.mxu0 %v241
    %493 = vmatmul.mubr.bf16.gmra.mrb[0].mxu0 %v240
    %v494 = vpop.f32.mrb[0].mxu0
    %v495 = vadd.f32 0.0, %v494
    %v496 = vpop.f32.mrb[0].mxu0
    %v497 = vpop.f32.mrb[0].mxu0
    %v498 = vadd.f32 0.0, %v497
    %v499 = vpop.f32.mrb[0].mxu0
    %500 = vmatprep.mubr.bf16.mxu0 %v243
    %501 = vmatmul.mubr.bf16.gmra.mrb[0].mxu0 %v242
    %v502 = vpop.f32.mrb[0].mxu0
    %v503 = vadd.f32 0.0, %v502
    %v504 = vpop.f32.mrb[0].mxu0
    %v505 = vpop.f32.mrb[0].mxu0
    %v506 = vadd.f32 0.0, %v505
    %v507 = vpop.f32.mrb[0].mxu0
    %508 = vmatprep.mubr.bf16.mxu0 %v245
    %509 = vmatmul.mubr.bf16.gmra.mrb[0].mxu0 %v244
    %v510 = vpop.f32.mrb[0].mxu0
    %v511 = vadd.f32 0.0, %v510
    %v512 = vpop.f32.mrb[0].mxu0
    %v513 = vpop.f32.mrb[0].mxu0
    %v514 = vadd.f32 0.0, %v513
    %v515 = vpop.f32.mrb[0].mxu0
    %516 = vmatprep.mubr.bf16.mxu0 %v247
    %517 = vmatmul.mubr.bf16.gmra.mrb[0].mxu0 %v246
    %v518 = vpop.f32.mrb[0].mxu0
    %v519 = vadd.f32 0.0, %v518
    %v520 = vpop.f32.mrb[0].mxu0
    %v521 = vpop.f32.mrb[0].mxu0
    %v522 = vadd.f32 0.0, %v521
    %v523 = vpop.f32.mrb[0].mxu0
    %524 = vmatprep.mubr.bf16.mxu0 %v249
    %525 = vmatmul.mubr.bf16.gmra.mrb[0].mxu0 %v248
    %v526 = vpop.f32.mrb[0].mxu0
    %v527 = vadd.f32 0.0, %v526
    %v528 = vpop.f32.mrb[0].mxu0
    %v529 = vpop.f32.mrb[0].mxu0
    %v530 = vadd.f32 0.0, %v529
    %v531 = vpop.f32.mrb[0].mxu0
    %532 = vmatprep.mubr.bf16.mxu0 %v251
    %533 = vmatmul.mubr.bf16.gmra.mrb[0].mxu0 %v250
    %v534 = vpop.f32.mrb[0].mxu0
    %v535 = vadd.f32 0.0, %v534
    %v536 = vpop.f32.mrb[0].mxu0
    %v537 = vpop.f32.mrb[0].mxu0
    %v538 = vadd.f32 0.0, %v537
    %v539 = vpop.f32.mrb[0].mxu0
    %540 = vdwg.mxu0
    %v541 = vpack.c.bf16 %v418, %v415
    %v542 = vpack.c.bf16 %v426, %v423
    %v543 = vpack.c.bf16 %v434, %v431
    %v544 = vpack.c.bf16 %v442, %v439
    %v545 = vpack.c.bf16 %v450, %v447
    %v546 = vpack.c.bf16 %v458, %v455
    %v547 = vpack.c.bf16 %v466, %v463
    %v548 = vpack.c.bf16 %v474, %v471
    %v549 = vpack.c.bf16 %v482, %v479
    %v550 = vpack.c.bf16 %v490, %v487
    %v551 = vpack.c.bf16 %v498, %v495
    %v552 = vpack.c.bf16 %v506, %v503
    %v553 = vpack.c.bf16 %v514, %v511
    %v554 = vpack.c.bf16 %v522, %v519
    %v555 = vpack.c.bf16 %v530, %v527
    %v556 = vpack.c.bf16 %v538, %v535
    %v557 = vld [vmem:[#allocation7] sm:$0xf]
    %v558 = vld [vmem:[#allocation7 + $0x4] sm:$0xf]
    %v559 = vld [vmem:[#allocation7 + $0x8] sm:$0xf]
    %v560 = vld [vmem:[#allocation7 + $0xc] sm:$0xf]
    %v561 = vld [vmem:[#allocation7 + $0x10] sm:$0xf]
    %v562 = vld [vmem:[#allocation7 + $0x14] sm:$0xf]
    %v563 = vld [vmem:[#allocation7 + $0x18] sm:$0xf]
    %v564 = vld [vmem:[#allocation7 + $0x1c] sm:$0xf]
    %v565 = vld [vmem:[#allocation7 + $0x20] sm:$0xf]
    %v566 = vld [vmem:[#allocation7 + $0x24] sm:$0xf]
    %v567 = vld [vmem:[#allocation7 + $0x28] sm:$0xf]
    %v568 = vld [vmem:[#allocation7 + $0x2c] sm:$0xf]
    %v569 = vld [vmem:[#allocation7 + $0x30] sm:$0xf]
    %v570 = vld [vmem:[#allocation7 + $0x34] sm:$0xf]
    %v571 = vld [vmem:[#allocation7 + $0x38] sm:$0xf]
    %v572 = vld [vmem:[#allocation7 + $0x3c] sm:$0xf]
    %v573 = vld [vmem:[%s3] sm:$0x1]
    %v575 = vlaneseq
    %v576 = vshrl.u32 %v575, 7
    %v577 = vsub.s32 0, %v576
    %v578 = vrot.slane %v573, %v577
    %v596 = vunpack.c.l.b16 %v557
    %v597 = vunpack.c.l.b16 %v558
    %v598 = vunpack.c.l.b16 %v559
    %v599 = vunpack.c.l.b16 %v560
    %v600 = vunpack.c.l.b16 %v561
    %v601 = vunpack.c.l.b16 %v562
    %v602 = vunpack.c.l.b16 %v563
    %v603 = vunpack.c.l.b16 %v564
    %v604 = vunpack.c.l.b16 %v565
    %v605 = vunpack.c.l.b16 %v566
    %v606 = vunpack.c.l.b16 %v567
    %v607 = vunpack.c.l.b16 %v568
    %v608 = vunpack.c.l.b16 %v569
    %v609 = vunpack.c.l.b16 %v570
    %v610 = vunpack.c.l.b16 %v571
    %v611 = vunpack.c.l.b16 %v572
    %v612 = vpack.c.b16 %v597, %v596
    %v613 = vpack.c.b16 %v599, %v598
    %v614 = vpack.c.b16 %v601, %v600
    %v615 = vpack.c.b16 %v603, %v602
    %v616 = vpack.c.b16 %v605, %v604
    %v617 = vpack.c.b16 %v607, %v606
    %v618 = vpack.c.b16 %v609, %v608
    %v619 = vpack.c.b16 %v611, %v610
    %628 = vmatprep.subr.bf16.mxu0 0
    %629 = vmatpush1.bf16.msra.mxu0 %v612
    %630 = vmatprep.subr.bf16.mxu0 0
    %631 = vmatpush1.bf16.msra.mxu0 %v613
    %632 = vmatprep.subr.bf16.mxu0 0
    %633 = vmatpush1.bf16.msra.mxu0 %v614
    %634 = vmatprep.subr.bf16.mxu0 0
    %635 = vmatpush1.bf16.msra.mxu0 %v615
    %636 = vmatprep.subr.bf16.mxu0 0
    %637 = vmatpush1.bf16.msra.mxu0 %v616
    %638 = vmatprep.subr.bf16.mxu0 0
    %639 = vmatpush1.bf16.msra.mxu0 %v617
    %640 = vmatprep.subr.bf16.mxu0 0
    %641 = vmatpush1.bf16.msra.mxu0 %v618
    %642 = vmatprep.subr.bf16.mxu0 0
    %643 = vmatpush1.bf16.msra.mxu0 %v619
    %644 = vmatprep.subr.bf16.mxu0 0
    %645 = vmatpush1.bf16.msra.mxu0 0
    %646 = vmatprep.subr.bf16.mxu0 0
    %647 = vmatpush1.bf16.msra.mxu0 0
    %648 = vmatprep.subr.bf16.mxu0 0
    %649 = vmatpush1.bf16.msra.mxu0 0
    %650 = vmatprep.subr.bf16.mxu0 0
    %651 = vmatpush1.bf16.msra.mxu0 0
    %652 = vmatprep.subr.bf16.mxu0 0
    %653 = vmatpush1.bf16.msra.mxu0 0
    %654 = vmatprep.subr.bf16.mxu0 0
    %655 = vmatpush1.bf16.msra.mxu0 0
    %656 = vmatprep.subr.bf16.mxu0 0
    %657 = vmatpush1.bf16.msra.mxu0 0
    %658 = vmatprep.subr.bf16.mxu0 0
    %659 = vmatpush1.bf16.msra.mxu0 0
    %660 = vmatprep.mubr.bf16.mxu0 0
    %661 = vmatmul.mubr.bf16.gmra.mrb[0].mxu0 %v541
    %v662 = vpop.f32.mrb[0].mxu0
    %v663 = vadd.f32 %v578, %v662
    %v664 = vpop.f32.mrb[0].mxu0
    %v665 = vpop.f32.mrb[0].mxu0
    %v666 = vadd.f32 %v578, %v665
    %v667 = vpop.f32.mrb[0].mxu0
    %668 = vmatprep.mubr.bf16.mxu0 0
    %669 = vmatmul.mubr.bf16.gmra.mrb[0].mxu0 %v542
    %v670 = vpop.f32.mrb[0].mxu0
    %v671 = vadd.f32 %v578, %v670
    %v672 = vpop.f32.mrb[0].mxu0
    %v673 = vpop.f32.mrb[0].mxu0
    %v674 = vadd.f32 %v578, %v673
    %v675 = vpop.f32.mrb[0].mxu0
    %676 = vmatprep.mubr.bf16.mxu0 0
    %677 = vmatmul.mubr.bf16.gmra.mrb[0].mxu0 %v543
    %v678 = vpop.f32.mrb[0].mxu0
    %v679 = vadd.f32 %v578, %v678
    %v680 = vpop.f32.mrb[0].mxu0
    %v681 = vpop.f32.mrb[0].mxu0
    %v682 = vadd.f32 %v578, %v681
    %v683 = vpop.f32.mrb[0].mxu0
    %684 = vmatprep.mubr.bf16.mxu0 0
    %685 = vmatmul.mubr.bf16.gmra.mrb[0].mxu0 %v544
    %v686 = vpop.f32.mrb[0].mxu0
    %v687 = vadd.f32 %v578, %v686
    %v688 = vpop.f32.mrb[0].mxu0
    %v689 = vpop.f32.mrb[0].mxu0
    %v690 = vadd.f32 %v578, %v689
    %v691 = vpop.f32.mrb[0].mxu0
    %692 = vmatprep.mubr.bf16.mxu0 0
    %693 = vmatmul.mubr.bf16.gmra.mrb[0].mxu0 %v545
    %v694 = vpop.f32.mrb[0].mxu0
    %v695 = vadd.f32 %v578, %v694
    %v696 = vpop.f32.mrb[0].mxu0
    %v697 = vpop.f32.mrb[0].mxu0
    %v698 = vadd.f32 %v578, %v697
    %v699 = vpop.f32.mrb[0].mxu0
    %700 = vmatprep.mubr.bf16.mxu0 0
    %701 = vmatmul.mubr.bf16.gmra.mrb[0].mxu0 %v546
    %v702 = vpop.f32.mrb[0].mxu0
    %v703 = vadd.f32 %v578, %v702
    %v704 = vpop.f32.mrb[0].mxu0
    %v705 = vpop.f32.mrb[0].mxu0
    %v706 = vadd.f32 %v578, %v705
    %v707 = vpop.f32.mrb[0].mxu0
    %708 = vmatprep.mubr.bf16.mxu0 0
    %709 = vmatmul.mubr.bf16.gmra.mrb[0].mxu0 %v547
    %v710 = vpop.f32.mrb[0].mxu0
    %v711 = vadd.f32 %v578, %v710
    %v712 = vpop.f32.mrb[0].mxu0
    %v713 = vpop.f32.mrb[0].mxu0
    %v714 = vadd.f32 %v578, %v713
    %v715 = vpop.f32.mrb[0].mxu0
    %716 = vmatprep.mubr.bf16.mxu0 0
    %717 = vmatmul.mubr.bf16.gmra.mrb[0].mxu0 %v548
    %v718 = vpop.f32.mrb[0].mxu0
    %v719 = vadd.f32 %v578, %v718
    %v720 = vpop.f32.mrb[0].mxu0
    %v721 = vpop.f32.mrb[0].mxu0
    %v722 = vadd.f32 %v578, %v721
    %v723 = vpop.f32.mrb[0].mxu0
    %724 = vmatprep.mubr.bf16.mxu0 0
    %725 = vmatmul.mubr.bf16.gmra.mrb[0].mxu0 %v549
    %v726 = vpop.f32.mrb[0].mxu0
    %v727 = vadd.f32 %v578, %v726
    %v728 = vpop.f32.mrb[0].mxu0
    %v729 = vpop.f32.mrb[0].mxu0
    %v730 = vadd.f32 %v578, %v729
    %v731 = vpop.f32.mrb[0].mxu0
    %732 = vmatprep.mubr.bf16.mxu0 0
    %733 = vmatmul.mubr.bf16.gmra.mrb[0].mxu0 %v550
    %v734 = vpop.f32.mrb[0].mxu0
    %v735 = vadd.f32 %v578, %v734
    %v736 = vpop.f32.mrb[0].mxu0
    %v737 = vpop.f32.mrb[0].mxu0
    %v738 = vadd.f32 %v578, %v737
    %v739 = vpop.f32.mrb[0].mxu0
    %740 = vmatprep.mubr.bf16.mxu0 0
    %741 = vmatmul.mubr.bf16.gmra.mrb[0].mxu0 %v551
    %v742 = vpop.f32.mrb[0].mxu0
    %v743 = vadd.f32 %v578, %v742
    %v744 = vpop.f32.mrb[0].mxu0
    %v745 = vpop.f32.mrb[0].mxu0
    %v746 = vadd.f32 %v578, %v745
    %v747 = vpop.f32.mrb[0].mxu0
    %748 = vmatprep.mubr.bf16.mxu0 0
    %749 = vmatmul.mubr.bf16.gmra.mrb[0].mxu0 %v552
    %v750 = vpop.f32.mrb[0].mxu0
    %v751 = vadd.f32 %v578, %v750
    %v752 = vpop.f32.mrb[0].mxu0
    %v753 = vpop.f32.mrb[0].mxu0
    %v754 = vadd.f32 %v578, %v753
    %v755 = vpop.f32.mrb[0].mxu0
    %756 = vmatprep.mubr.bf16.mxu0 0
    %757 = vmatmul.mubr.bf16.gmra.mrb[0].mxu0 %v553
    %v758 = vpop.f32.mrb[0].mxu0
    %v759 = vadd.f32 %v578, %v758
    %v760 = vpop.f32.mrb[0].mxu0
    %v761 = vpop.f32.mrb[0].mxu0
    %v762 = vadd.f32 %v578, %v761
    %v763 = vpop.f32.mrb[0].mxu0
    %764 = vmatprep.mubr.bf16.mxu0 0
    %765 = vmatmul.mubr.bf16.gmra.mrb[0].mxu0 %v554
    %v766 = vpop.f32.mrb[0].mxu0
    %v767 = vadd.f32 %v578, %v766
    %v768 = vpop.f32.mrb[0].mxu0
    %v769 = vpop.f32.mrb[0].mxu0
    %v770 = vadd.f32 %v578, %v769
    %v771 = vpop.f32.mrb[0].mxu0
    %772 = vmatprep.mubr.bf16.mxu0 0
    %773 = vmatmul.mubr.bf16.gmra.mrb[0].mxu0 %v555
    %v774 = vpop.f32.mrb[0].mxu0
    %v775 = vadd.f32 %v578, %v774
    %v776 = vpop.f32.mrb[0].mxu0
    %v777 = vpop.f32.mrb[0].mxu0
    %v778 = vadd.f32 %v578, %v777
    %v779 = vpop.f32.mrb[0].mxu0
    %780 = vmatprep.mubr.bf16.mxu0 0
    %781 = vmatmul.mubr.bf16.gmra.mrb[0].mxu0 %v556
    %v782 = vpop.f32.mrb[0].mxu0
    %v783 = vadd.f32 %v578, %v782
    %v784 = vpop.f32.mrb[0].mxu0
    %v785 = vpop.f32.mrb[0].mxu0
    %v786 = vadd.f32 %v578, %v785
    %v787 = vpop.f32.mrb[0].mxu0
    %788 = vdwg.mxu0
    %v789 = vmax.f32 %v663, 0.0
    %v790 = vmax.f32 %v666, 0.0
    %v791 = vmax.f32 %v671, 0.0
    %v792 = vmax.f32 %v674, 0.0
    %v793 = vmax.f32 %v679, 0.0
    %v794 = vmax.f32 %v682, 0.0
    %v795 = vmax.f32 %v687, 0.0
    %v796 = vmax.f32 %v690, 0.0
    %v797 = vmax.f32 %v695, 0.0
    %v798 = vmax.f32 %v698, 0.0
    %v799 = vmax.f32 %v703, 0.0
    %v800 = vmax.f32 %v706, 0.0
    %v801 = vmax.f32 %v711, 0.0
    %v802 = vmax.f32 %v714, 0.0
    %v803 = vmax.f32 %v719, 0.0
    %v804 = vmax.f32 %v722, 0.0
    %v805 = vmax.f32 %v727, 0.0
    %v806 = vmax.f32 %v730, 0.0
    %v807 = vmax.f32 %v735, 0.0
    %v808 = vmax.f32 %v738, 0.0
    %v809 = vmax.f32 %v743, 0.0
    %v810 = vmax.f32 %v746, 0.0
    %v811 = vmax.f32 %v751, 0.0
    %v812 = vmax.f32 %v754, 0.0
    %v813 = vmax.f32 %v759, 0.0
    %v814 = vmax.f32 %v762, 0.0
    %v815 = vmax.f32 %v767, 0.0
    %v816 = vmax.f32 %v770, 0.0
    %v817 = vmax.f32 %v775, 0.0
    %v818 = vmax.f32 %v778, 0.0
    %v819 = vmax.f32 %v783, 0.0
    %v820 = vmax.f32 %v786, 0.0
    %v821 = vpack.c.bf16 %v790, %v789
    %v822 = vpack.c.bf16 %v792, %v791
    %v823 = vpack.c.bf16 %v794, %v793
    %v824 = vpack.c.bf16 %v796, %v795
    %v825 = vpack.c.bf16 %v798, %v797
    %v826 = vpack.c.bf16 %v800, %v799
    %v827 = vpack.c.bf16 %v802, %v801
    %v828 = vpack.c.bf16 %v804, %v803
    %v829 = vpack.c.bf16 %v806, %v805
    %v830 = vpack.c.bf16 %v808, %v807
    %v831 = vpack.c.bf16 %v810, %v809
    %v832 = vpack.c.bf16 %v812, %v811
    %v833 = vpack.c.bf16 %v814, %v813
    %v834 = vpack.c.bf16 %v816, %v815
    %v835 = vpack.c.bf16 %v818, %v817
    %v836 = vpack.c.bf16 %v820, %v819
    %v853 = vunpack.c.l.b16 %v821
    %v854 = vunpack.c.h.b16 %v821
    %v855 = vunpack.c.l.b16 %v822
    %v856 = vunpack.c.h.b16 %v822
    %v857 = vunpack.c.l.b16 %v823
    %v858 = vunpack.c.h.b16 %v823
    %v859 = vunpack.c.l.b16 %v824
    %v860 = vunpack.c.h.b16 %v824
    %v861 = vunpack.c.l.b16 %v825
    %v862 = vunpack.c.h.b16 %v825
    %v863 = vunpack.c.l.b16 %v826
    %v864 = vunpack.c.h.b16 %v826
    %v865 = vunpack.c.l.b16 %v827
    %v866 = vunpack.c.h.b16 %v827
    %v867 = vunpack.c.l.b16 %v828
    %v868 = vunpack.c.h.b16 %v828
    %v869 = vunpack.c.l.b16 %v829
    %v870 = vunpack.c.h.b16 %v829
    %v871 = vunpack.c.l.b16 %v830
    %v872 = vunpack.c.h.b16 %v830
    %v873 = vunpack.c.l.b16 %v831
    %v874 = vunpack.c.h.b16 %v831
    %v875 = vunpack.c.l.b16 %v832
    %v876 = vunpack.c.h.b16 %v832
    %v877 = vunpack.c.l.b16 %v833
    %v878 = vunpack.c.h.b16 %v833
    %v879 = vunpack.c.l.b16 %v834
    %v880 = vunpack.c.h.b16 %v834
    %v881 = vunpack.c.l.b16 %v835
    %v882 = vunpack.c.h.b16 %v835
    %v883 = vunpack.c.l.b16 %v836
    %v884 = vunpack.c.h.b16 %v836
    %v885 = vpack.c.b16 %v853, %v853
    %v886 = vpack.c.b16 %v854, %v854
    %v887 = vpack.c.b16 %v855, %v855
    %v888 = vpack.c.b16 %v856, %v856
    %v889 = vpack.c.b16 %v857, %v857
    %v890 = vpack.c.b16 %v858, %v858
    %v891 = vpack.c.b16 %v859, %v859
    %v892 = vpack.c.b16 %v860, %v860
    %v893 = vpack.c.b16 %v861, %v861
    %v894 = vpack.c.b16 %v862, %v862
    %v895 = vpack.c.b16 %v863, %v863
    %v896 = vpack.c.b16 %v864, %v864
    %v897 = vpack.c.b16 %v865, %v865
    %v898 = vpack.c.b16 %v866, %v866
    %v899 = vpack.c.b16 %v867, %v867
    %v900 = vpack.c.b16 %v868, %v868
    %v901 = vpack.c.b16 %v869, %v869
    %v902 = vpack.c.b16 %v870, %v870
    %v903 = vpack.c.b16 %v871, %v871
    %v904 = vpack.c.b16 %v872, %v872
    %v905 = vpack.c.b16 %v873, %v873
    %v906 = vpack.c.b16 %v874, %v874
    %v907 = vpack.c.b16 %v875, %v875
    %v908 = vpack.c.b16 %v876, %v876
    %v909 = vpack.c.b16 %v877, %v877
    %v910 = vpack.c.b16 %v878, %v878
    %v911 = vpack.c.b16 %v879, %v879
    %v912 = vpack.c.b16 %v880, %v880
    %v913 = vpack.c.b16 %v881, %v881
    %v914 = vpack.c.b16 %v882, %v882
    %v915 = vpack.c.b16 %v883, %v883
    %v916 = vpack.c.b16 %v884, %v884
    %949 = vst [vmem:[#allocation8] sm:$0xf] %v885
    %950 = vst [vmem:[#allocation8 + $0x4] sm:$0xf] %v886
    %951 = vst [vmem:[#allocation8 + $0x8] sm:$0xf] %v887
    %952 = vst [vmem:[#allocation8 + $0xc] sm:$0xf] %v888
    %953 = vst [vmem:[#allocation8 + $0x10] sm:$0xf] %v889
    %954 = vst [vmem:[#allocation8 + $0x14] sm:$0xf] %v890
    %955 = vst [vmem:[#allocation8 + $0x18] sm:$0xf] %v891
    %956 = vst [vmem:[#allocation8 + $0x1c] sm:$0xf] %v892
    %957 = vst [vmem:[#allocation8 + $0x20] sm:$0xf] %v893
    %958 = vst [vmem:[#allocation8 + $0x24] sm:$0xf] %v894
    %959 = vst [vmem:[#allocation8 + $0x28] sm:$0xf] %v895
    %960 = vst [vmem:[#allocation8 + $0x2c] sm:$0xf] %v896
    %961 = vst [vmem:[#allocation8 + $0x30] sm:$0xf] %v897
    %962 = vst [vmem:[#allocation8 + $0x34] sm:$0xf] %v898
    %963 = vst [vmem:[#allocation8 + $0x38] sm:$0xf] %v899
    %964 = vst [vmem:[#allocation8 + $0x3c] sm:$0xf] %v900
    %965 = vst [vmem:[#allocation8 + $0x40] sm:$0xf] %v901
    %966 = vst [vmem:[#allocation8 + $0x44] sm:$0xf] %v902
    %967 = vst [vmem:[#allocation8 + $0x48] sm:$0xf] %v903
    %968 = vst [vmem:[#allocation8 + $0x4c] sm:$0xf] %v904
    %969 = vst [vmem:[#allocation8 + $0x50] sm:$0xf] %v905
    %970 = vst [vmem:[#allocation8 + $0x54] sm:$0xf] %v906
    %971 = vst [vmem:[#allocation8 + $0x58] sm:$0xf] %v907
    %972 = vst [vmem:[#allocation8 + $0x5c] sm:$0xf] %v908
    %973 = vst [vmem:[#allocation8 + $0x60] sm:$0xf] %v909
    %974 = vst [vmem:[#allocation8 + $0x64] sm:$0xf] %v910
    %975 = vst [vmem:[#allocation8 + $0x68] sm:$0xf] %v911
    %976 = vst [vmem:[#allocation8 + $0x6c] sm:$0xf] %v912
    %977 = vst [vmem:[#allocation8 + $0x70] sm:$0xf] %v913
    %978 = vst [vmem:[#allocation8 + $0x74] sm:$0xf] %v914
    %979 = vst [vmem:[#allocation8 + $0x78] sm:$0xf] %v915
    %980 = vst [vmem:[#allocation8 + $0x7c] sm:$0xf] %v916
    // Predicated region
    $region30: #{tpu_custom_call.1} parent=1 // pred_check
      _
    $region31: #{tpu_custom_call.1} parent=1 // pred_check_branch
      %982 = sbr.rel (0) target = $region33
    $region32: #{tpu_custom_call.1} parent=1 // pred_region
      %s984 = ssub.s32 2048, 2048
      %985 = vsyncadd [#allocation4], %s984
      %s986 = sshll.u32 [#allocation8], 4
      %s987 = int_to_ptr.vmem [resolvable:$true] %s986
      %992 = dma.vmem_to_hbm [thread:$0]  %s987, 2048, %s4, [#allocation4], 64, 64, 4
    $region33: #{tpu_custom_call.1} parent=1 // pred_fallthru
      _
    // Predicated region
    $region34: #{tpu_custom_call.1} parent=1 // pred_check
      _
    $region35: #{tpu_custom_call.1} parent=1 // pred_check_branch
      %994 = sbr.rel (0) target = $region37
    $region36: #{tpu_custom_call.1} parent=1 // pred_region
      %995 = dma.done [#allocation4], 2048
    $region37: #{tpu_custom_call.1} parent=1 // pred_fallthru
      _
    %996 = vsyncpa [#allocation3], 1
    %997 = vsyncpa [#allocation6], 1
    %998 = vsyncpa [#allocation4], 1

</llo_original>
